<compile_context>
chip_gen: v5e
topology: v5e:2x2
jax: 0.10.0
libtpu: 0.0.40
codegen_flags: <defaults>
</compile_context>

<pallas_src>
import functools

import jax
import jax.numpy as jnp
from jax.experimental import pallas as pl
from jax.experimental.pallas import tpu as pltpu


def _attention_kernel(x_ref, wqkv_ref, wproj_ref, bproj_ref,
                      out_ref, kmean_ref, o_slab_ref, *, num_heads, scale):
    # x_ref:      (N, C)   tokens of one batch element (leading dim squeezed)
    # wqkv_ref:   (C, 3C)  qkv weight (in, out); cols = [q heads | k | v]
    # wproj_ref:  (C, C)   output projection weight (in, out)
    # bproj_ref:  (1, C)   output projection bias
    # out_ref:    (N, C)   attention output
    # kmean_ref:  (N, d)   k.mean(over heads)
    # o_slab_ref: (N, C)   VMEM scratch: concatenated head outputs
    N, C = x_ref.shape
    d = C // num_heads

    x = x_ref[...]
    mxu_dtype = x.dtype          # bf16 inputs -> bf16 MXU operands, f32 accum

    # Fused QKV projection (module default qkv_bias=False -> no bias).
    qkv = jnp.dot(x, wqkv_ref[...],
                  preferred_element_type=jnp.float32)            # (N, 3C) f32

    # One bulk cast to the MXU operand dtype (no-op for f32 inputs); the
    # softmax scale is folded into q here with a single (N, C) multiply.
    q_all = (qkv[:, :C] * scale).astype(mxu_dtype)
    k_all = qkv[:, C:2 * C].astype(mxu_dtype)
    v_all = qkv[:, 2 * C:].astype(mxu_dtype)

    ksum = jnp.zeros((N, d), jnp.float32)

    for h in range(num_heads):           # static unroll (small H)
        q_h = q_all[:, h * d:(h + 1) * d]
        k_h = k_all[:, h * d:(h + 1) * d]
        v_h = v_all[:, h * d:(h + 1) * d]

        ksum = ksum + k_h.astype(jnp.float32)

        # scores = (q*scale) @ k^T via last-dim contraction (no transpose).
        # token_sizes == ones in the module forward -> log bias is exactly 0.
        s = jax.lax.dot_general(q_h, k_h,
                                dimension_numbers=(((1,), (1,)), ((), ())),
                                preferred_element_type=jnp.float32)  # (N, N)

        # Numerically stable softmax, normalization deferred past p @ v.
        m = jnp.max(s, axis=-1, keepdims=True)
        p = jnp.exp(s - m)
        rsum = jnp.sum(p, axis=-1, keepdims=True)                # (N, 1) f32

        o_h = jnp.dot(p.astype(mxu_dtype), v_h,
                      preferred_element_type=jnp.float32)        # (N, d) f32
        o_h = o_h * pl.reciprocal(rsum, approx=True)

        # Stage at the head's static lane offset; projection is fused below.
        o_slab_ref[:, h * d:(h + 1) * d] = o_h.astype(o_slab_ref.dtype)

    # Single full-depth output projection + bias (replaces H K=d matmuls).
    out = jnp.dot(o_slab_ref[...], wproj_ref[...],
                  preferred_element_type=jnp.float32) + bproj_ref[...]
    out_ref[...] = out.astype(out_ref.dtype)
    kmean_ref[...] = (ksum * (1.0 / num_heads)).astype(kmean_ref.dtype)


def _round_up(v, m):
    return -(-v // m) * m


@functools.partial(jax.jit, static_argnames=("num_heads",))
def attention_forward(x, w_qkv, w_proj, b_proj, *, num_heads=3):
    """x: (B, N, C); w_qkv: (C, 3C); w_proj: (C, C); b_proj: (C,).

    Weights are stored pre-transposed as (in_features, out_features), i.e.
    w = W_pytorch.T, so the kernel computes x @ w + b.
    Returns (attn_out (B, N, C), k_mean (B, N, C // num_heads)).
    """
    B, N, C = x.shape
    assert C % num_heads == 0, "dim must be divisible by num_heads"
    d = C // num_heads
    scale = float(d) ** -0.5

    b_proj2 = b_proj.reshape(1, C)

    # ---- VMEM budget (lane/sublane padded) -------------------------------
    isz = jnp.dtype(x.dtype).itemsize
    Ns = _round_up(N, 8)            # sublane-padded token count
    Nl = _round_up(N, 128)          # lane-padded token count (scores tile)
    Cl = _round_up(C, 128)
    C3l = _round_up(3 * C, 128)
    dl = _round_up(d, 128)
    Cs = _round_up(C, 8)

    # Auto-pipelined blocks are double-buffered (inputs + outputs).
    blk_bytes = 2 * isz * (Ns * Cl          # x tile
                           + Cs * C3l       # w_qkv (resident)
                           + Cs * Cl        # w_proj (resident)
                           + 8 * Cl         # b_proj
                           + Ns * Cl        # out tile
                           + Ns * dl)       # k_mean tile
    scratch_bytes = isz * Ns * Cl           # o_slab (single-buffered scratch)
    # f32 in-kernel intermediates: qkv + cast q/k/v copies, scores + exp tile,
    # projected output, ksum — with 2x slack for unrolled-loop liveness.
    tmp_bytes = 4 * (2 * Ns * C3l + 2 * Ns * Nl + Ns * Cl + 2 * Ns * dl)
    need = blk_bytes + scratch_bytes + 2 * tmp_bytes + (4 << 20)

    try:   # derive the cap from the actual chip, leave ~20% headroom
        vmem_cap = int(pltpu.get_tpu_info().vmem_capacity_bytes)
    except Exception:  # pragma: no cover - conservative fallback
        vmem_cap = 64 * 1024 * 1024
    vmem_limit = max(32 * 1024 * 1024, min(int(0.8 * vmem_cap), need))

    kernel = functools.partial(_attention_kernel,
                               num_heads=num_heads, scale=scale)

    out, kmean = pl.pallas_call(
        kernel,
        out_shape=(jax.ShapeDtypeStruct((B, N, C), x.dtype),
                   jax.ShapeDtypeStruct((B, N, d), x.dtype)),
        grid_spec=pltpu.PrefetchScalarGridSpec(
            num_scalar_prefetch=0,
            grid=(B,),
            in_specs=[
                pl.BlockSpec((None, N, C), lambda b: (b, 0, 0)),   # x (per batch)
                pl.BlockSpec((C, 3 * C), lambda b: (0, 0)),        # w_qkv resident
                pl.BlockSpec((C, C), lambda b: (0, 0)),            # w_proj resident
                pl.BlockSpec((1, C), lambda b: (0, 0)),            # b_proj
            ],
            out_specs=[
                pl.BlockSpec((None, N, C), lambda b: (b, 0, 0)),   # attn out
                pl.BlockSpec((None, N, d), lambda b: (b, 0, 0)),   # k mean
            ],
            scratch_shapes=[pltpu.VMEM((N, C), x.dtype)],          # o_slab
        ),
        compiler_params=pltpu.CompilerParams(
            dimension_semantics=("parallel",),   # batch axis -> megacore / 2 TCs
            vmem_limit_bytes=vmem_limit,
        ),
    )(x, w_qkv, w_proj, b_proj2)
    return out, kmean


def reference_attention(x, w_qkv, w_proj, b_proj, *, num_heads=3):
    """Pure-JAX reference matching the PyTorch module (float32, high precision)."""
    B, N, C = x.shape
    d = C // num_heads
    scale = float(d) ** -0.5
    hp = jax.lax.Precision.HIGHEST

    qkv = jnp.einsum("bnc,ck->bnk", x, w_qkv, precision=hp)
    qkv = qkv.reshape(B, N, 3, num_heads, d).transpose(2, 0, 3, 1, 4)
    q, k, v = qkv[0], qkv[1], qkv[2]                     # (B, H, N, d)
    attn = jnp.einsum("bhnd,bhmd->bhnm", q, k, precision=hp) * scale
    # token_sizes = ones -> log term is 0
    attn = jax.nn.softmax(attn, axis=-1)
    o = jnp.einsum("bhnm,bhmd->bhnd", attn, v, precision=hp)
    o = o.transpose(0, 2, 1, 3).reshape(B, N, C)
    o = jnp.einsum("bnc,co->bno", o, w_proj, precision=hp) + b_proj
    return o, k.mean(axis=1)


if __name__ == "__main__":
    # Small ViT-like shapes: batch=2, seq=16, dim=96, num_heads=3 (head_dim=32)
    B, N, C, num_heads = 2, 16, 96, 3
    d = C // num_heads

    key = jax.random.PRNGKey(0)
    kx, k1, k2, k3 = jax.random.split(key, 4)

    x = jax.random.normal(kx, (B, N, C), dtype=jnp.float32)
    # Kernel weight layout is (in_features, out_features) == W_pytorch.T
    w_qkv = jax.random.normal(k1, (C, 3 * C), dtype=jnp.float32) * 0.1
    w_proj = jax.random.normal(k2, (C, C), dtype=jnp.float32) * 0.1
    b_proj = jax.random.normal(k3, (C,), dtype=jnp.float32) * 0.1

    out, kmean = attention_forward(x, w_qkv, w_proj, b_proj, num_heads=num_heads)
    jax.block_until_ready((out, kmean))

    ref_out, ref_kmean = reference_attention(x, w_qkv, w_proj, b_proj,
                                             num_heads=num_heads)
    assert out.shape == (B, N, C)
    assert kmean.shape == (B, N, d)
    assert jnp.allclose(out, ref_out, atol=1e-2, rtol=1e-2)
    assert jnp.allclose(kmean, ref_kmean, atol=1e-2, rtol=1e-2)

    print("KERNEL_OK")
</pallas_src>

<mosaic_0001>
module attributes {stable_mosaic.version = 11 : i64} {
  func.func @_attention_kernel(%arg0: i32, %arg1: memref<1x16x96xf32, #tpu.memory_space<vmem>>, %arg2: memref<96x288xf32, #tpu.memory_space<vmem>>, %arg3: memref<96x96xf32, #tpu.memory_space<vmem>>, %arg4: memref<1x96xf32, #tpu.memory_space<vmem>>, %arg5: memref<1x16x96xf32, #tpu.memory_space<vmem>>, %arg6: memref<1x16x32xf32, #tpu.memory_space<vmem>>, %arg7: memref<16x96xf32, #tpu.memory_space<vmem>>) attributes {dimension_semantics = [#tpu.dimension_semantics<parallel>], iteration_bounds = array<i64: 2>, scalar_prefetch = 0 : i64, scratch_operands = 1 : i64, tpu.core_type = #tpu.core_type<tc>, window_params = [{transform_indices = @transform_0, window_bounds = array<i64: 1, 16, 96>}, {pipeline_mode = #tpu.pipeline_mode<synchronous>, transform_indices = @transform_1, window_bounds = array<i64: 96, 288>}, {pipeline_mode = #tpu.pipeline_mode<synchronous>, transform_indices = @transform_2, window_bounds = array<i64: 96, 96>}, {pipeline_mode = #tpu.pipeline_mode<synchronous>, transform_indices = @transform_3, window_bounds = array<i64: 1, 96>}, {transform_indices = @transform_4, window_bounds = array<i64: 1, 16, 96>}, {transform_indices = @transform_5, window_bounds = array<i64: 1, 16, 32>}]} {
    %c0 = arith.constant 0 : index
    %c0_0 = arith.constant 0 : index
    %c0_1 = arith.constant 0 : index
    %0 = vector.load %arg1[%c0, %c0_0, %c0_1] : memref<1x16x96xf32, #tpu.memory_space<vmem>>, vector<1x16x96xf32>
    %1 = vector.shape_cast %0 : vector<1x16x96xf32> to vector<16x96xf32>
    %c0_2 = arith.constant 0 : index
    %c0_3 = arith.constant 0 : index
    %2 = vector.load %arg2[%c0_2, %c0_3] : memref<96x288xf32, #tpu.memory_space<vmem>>, vector<96x288xf32>
    %cst = arith.constant dense<0.000000e+00> : vector<16x288xf32>
    %3 = tpu.matmul %1, %2, %cst {dimension_numbers = #tpu.dot_dimension_numbers<[1], [0], [0], [1], [0, 0, 1, 1], [], []>} : vector<16x96xf32>, vector<96x288xf32>, vector<16x288xf32> -> vector<16x288xf32>
    %4 = vector.extract_strided_slice %3 {offsets = [0, 0], sizes = [16, 96], strides = [1, 1]} : vector<16x288xf32> to vector<16x96xf32>
    %cst_4 = arith.constant 0.176776692 : f32
    %5 = vector.broadcast %cst_4 : f32 to vector<16x96xf32>
    %6 = arith.mulf %4, %5 : vector<16x96xf32>
    %7 = vector.extract_strided_slice %3 {offsets = [0, 96], sizes = [16, 96], strides = [1, 1]} : vector<16x288xf32> to vector<16x96xf32>
    %8 = vector.extract_strided_slice %3 {offsets = [0, 192], sizes = [16, 96], strides = [1, 1]} : vector<16x288xf32> to vector<16x96xf32>
    %cst_5 = arith.constant 0.000000e+00 : f32
    %9 = vector.broadcast %cst_5 : f32 to vector<16x32xf32>
    %10 = vector.extract_strided_slice %6 {offsets = [0, 0], sizes = [16, 32], strides = [1, 1]} : vector<16x96xf32> to vector<16x32xf32>
    %11 = vector.extract_strided_slice %7 {offsets = [0, 0], sizes = [16, 32], strides = [1, 1]} : vector<16x96xf32> to vector<16x32xf32>
    %12 = vector.extract_strided_slice %8 {offsets = [0, 0], sizes = [16, 32], strides = [1, 1]} : vector<16x96xf32> to vector<16x32xf32>
    %13 = arith.addf %9, %11 : vector<16x32xf32>
    %cst_6 = arith.constant dense<0.000000e+00> : vector<16x16xf32>
    %14 = tpu.matmul %10, %11, %cst_6 {dimension_numbers = #tpu.dot_dimension_numbers<[1], [1], [0], [0], [0, 0, 1, 0], [], []>} : vector<16x32xf32>, vector<16x32xf32>, vector<16x16xf32> -> vector<16x16xf32>
    %cst_7 = arith.constant dense<0xFF800000> : vector<16xf32>
    %15 = vector.multi_reduction <maximumf>, %14, %cst_7 [1] : vector<16x16xf32> to vector<16xf32>
    %16 = vector.shape_cast %15 : vector<16xf32> to vector<16x1xf32>
    %17 = vector.broadcast %16 : vector<16x1xf32> to vector<16x16xf32>
    %18 = arith.subf %14, %17 : vector<16x16xf32>
    %19 = math.exp %18 : vector<16x16xf32>
    %cst_8 = arith.constant dense<0.000000e+00> : vector<16xf32>
    %20 = vector.multi_reduction <add>, %19, %cst_8 [1] : vector<16x16xf32> to vector<16xf32>
    %21 = vector.shape_cast %20 : vector<16xf32> to vector<16x1xf32>
    %cst_9 = arith.constant dense<0.000000e+00> : vector<16x32xf32>
    %22 = tpu.matmul %19, %12, %cst_9 {dimension_numbers = #tpu.dot_dimension_numbers<[1], [0], [0], [1], [0, 0, 1, 1], [], []>} : vector<16x16xf32>, vector<16x32xf32>, vector<16x32xf32> -> vector<16x32xf32>
    %23 = tpu.reciprocal %21 {approx = true} : vector<16x1xf32> -> vector<16x1xf32>
    %24 = vector.broadcast %23 : vector<16x1xf32> to vector<16x32xf32>
    %25 = arith.mulf %22, %24 : vector<16x32xf32>
    %c0_10 = arith.constant 0 : index
    %c0_11 = arith.constant 0 : index
    %26 = vector.load %arg7[%c0_10, %c0_11] : memref<16x96xf32, #tpu.memory_space<vmem>>, vector<16x32xf32>
    tpu.vector_store %arg7[%c0_10, %c0_11], %25 {strides = array<i32>} : memref<16x96xf32, #tpu.memory_space<vmem>>, vector<16x32xf32>,
    %27 = vector.extract_strided_slice %6 {offsets = [0, 32], sizes = [16, 32], strides = [1, 1]} : vector<16x96xf32> to vector<16x32xf32>
    %28 = vector.extract_strided_slice %7 {offsets = [0, 32], sizes = [16, 32], strides = [1, 1]} : vector<16x96xf32> to vector<16x32xf32>
    %29 = vector.extract_strided_slice %8 {offsets = [0, 32], sizes = [16, 32], strides = [1, 1]} : vector<16x96xf32> to vector<16x32xf32>
    %30 = arith.addf %13, %28 : vector<16x32xf32>
    %cst_12 = arith.constant dense<0.000000e+00> : vector<16x16xf32>
    %31 = tpu.matmul %27, %28, %cst_12 {dimension_numbers = #tpu.dot_dimension_numbers<[1], [1], [0], [0], [0, 0, 1, 0], [], []>} : vector<16x32xf32>, vector<16x32xf32>, vector<16x16xf32> -> vector<16x16xf32>
    %cst_13 = arith.constant dense<0xFF800000> : vector<16xf32>
    %32 = vector.multi_reduction <maximumf>, %31, %cst_13 [1] : vector<16x16xf32> to vector<16xf32>
    %33 = vector.shape_cast %32 : vector<16xf32> to vector<16x1xf32>
    %34 = vector.broadcast %33 : vector<16x1xf32> to vector<16x16xf32>
    %35 = arith.subf %31, %34 : vector<16x16xf32>
    %36 = math.exp %35 : vector<16x16xf32>
    %cst_14 = arith.constant dense<0.000000e+00> : vector<16xf32>
    %37 = vector.multi_reduction <add>, %36, %cst_14 [1] : vector<16x16xf32> to vector<16xf32>
    %38 = vector.shape_cast %37 : vector<16xf32> to vector<16x1xf32>
    %cst_15 = arith.constant dense<0.000000e+00> : vector<16x32xf32>
    %39 = tpu.matmul %36, %29, %cst_15 {dimension_numbers = #tpu.dot_dimension_numbers<[1], [0], [0], [1], [0, 0, 1, 1], [], []>} : vector<16x16xf32>, vector<16x32xf32>, vector<16x32xf32> -> vector<16x32xf32>
    %40 = tpu.reciprocal %38 {approx = true} : vector<16x1xf32> -> vector<16x1xf32>
    %41 = vector.broadcast %40 : vector<16x1xf32> to vector<16x32xf32>
    %42 = arith.mulf %39, %41 : vector<16x32xf32>
    %c0_16 = arith.constant 0 : index
    %c32 = arith.constant 32 : index
    %43 = vector.load %arg7[%c0_16, %c32] : memref<16x96xf32, #tpu.memory_space<vmem>>, vector<16x32xf32>
    tpu.vector_store %arg7[%c0_16, %c32], %42 {strides = array<i32>} : memref<16x96xf32, #tpu.memory_space<vmem>>, vector<16x32xf32>,
    %44 = vector.extract_strided_slice %6 {offsets = [0, 64], sizes = [16, 32], strides = [1, 1]} : vector<16x96xf32> to vector<16x32xf32>
    %45 = vector.extract_strided_slice %7 {offsets = [0, 64], sizes = [16, 32], strides = [1, 1]} : vector<16x96xf32> to vector<16x32xf32>
    %46 = vector.extract_strided_slice %8 {offsets = [0, 64], sizes = [16, 32], strides = [1, 1]} : vector<16x96xf32> to vector<16x32xf32>
    %47 = arith.addf %30, %45 : vector<16x32xf32>
    %cst_17 = arith.constant dense<0.000000e+00> : vector<16x16xf32>
    %48 = tpu.matmul %44, %45, %cst_17 {dimension_numbers = #tpu.dot_dimension_numbers<[1], [1], [0], [0], [0, 0, 1, 0], [], []>} : vector<16x32xf32>, vector<16x32xf32>, vector<16x16xf32> -> vector<16x16xf32>
    %cst_18 = arith.constant dense<0xFF800000> : vector<16xf32>
    %49 = vector.multi_reduction <maximumf>, %48, %cst_18 [1] : vector<16x16xf32> to vector<16xf32>
    %50 = vector.shape_cast %49 : vector<16xf32> to vector<16x1xf32>
    %51 = vector.broadcast %50 : vector<16x1xf32> to vector<16x16xf32>
    %52 = arith.subf %48, %51 : vector<16x16xf32>
    %53 = math.exp %52 : vector<16x16xf32>
    %cst_19 = arith.constant dense<0.000000e+00> : vector<16xf32>
    %54 = vector.multi_reduction <add>, %53, %cst_19 [1] : vector<16x16xf32> to vector<16xf32>
    %55 = vector.shape_cast %54 : vector<16xf32> to vector<16x1xf32>
    %cst_20 = arith.constant dense<0.000000e+00> : vector<16x32xf32>
    %56 = tpu.matmul %53, %46, %cst_20 {dimension_numbers = #tpu.dot_dimension_numbers<[1], [0], [0], [1], [0, 0, 1, 1], [], []>} : vector<16x16xf32>, vector<16x32xf32>, vector<16x32xf32> -> vector<16x32xf32>
    %57 = tpu.reciprocal %55 {approx = true} : vector<16x1xf32> -> vector<16x1xf32>
    %58 = vector.broadcast %57 : vector<16x1xf32> to vector<16x32xf32>
    %59 = arith.mulf %56, %58 : vector<16x32xf32>
    %c0_21 = arith.constant 0 : index
    %c64 = arith.constant 64 : index
    %60 = vector.load %arg7[%c0_21, %c64] : memref<16x96xf32, #tpu.memory_space<vmem>>, vector<16x32xf32>
    tpu.vector_store %arg7[%c0_21, %c64], %59 {strides = array<i32>} : memref<16x96xf32, #tpu.memory_space<vmem>>, vector<16x32xf32>,
    %c0_22 = arith.constant 0 : index
    %c0_23 = arith.constant 0 : index
    %61 = vector.load %arg7[%c0_22, %c0_23] : memref<16x96xf32, #tpu.memory_space<vmem>>, vector<16x96xf32>
    %c0_24 = arith.constant 0 : index
    %c0_25 = arith.constant 0 : index
    %62 = vector.load %arg3[%c0_24, %c0_25] : memref<96x96xf32, #tpu.memory_space<vmem>>, vector<96x96xf32>
    %cst_26 = arith.constant dense<0.000000e+00> : vector<16x96xf32>
    %63 = tpu.matmul %61, %62, %cst_26 {dimension_numbers = #tpu.dot_dimension_numbers<[1], [0], [0], [1], [0, 0, 1, 1], [], []>} : vector<16x96xf32>, vector<96x96xf32>, vector<16x96xf32> -> vector<16x96xf32>
    %c0_27 = arith.constant 0 : index
    %c0_28 = arith.constant 0 : index
    %64 = vector.load %arg4[%c0_27, %c0_28] : memref<1x96xf32, #tpu.memory_space<vmem>>, vector<1x96xf32>
    %65 = vector.broadcast %64 : vector<1x96xf32> to vector<16x96xf32>
    %66 = arith.addf %63, %65 : vector<16x96xf32>
    %c0_29 = arith.constant 0 : index
    %c0_30 = arith.constant 0 : index
    %c0_31 = arith.constant 0 : index
    %67 = vector.load %arg5[%c0_29, %c0_30, %c0_31] : memref<1x16x96xf32, #tpu.memory_space<vmem>>, vector<1x16x96xf32>
    %68 = vector.shape_cast %67 : vector<1x16x96xf32> to vector<16x96xf32>
    %69 = vector.shape_cast %66 : vector<16x96xf32> to vector<1x16x96xf32>
    tpu.vector_store %arg5[%c0_29, %c0_30, %c0_31], %69 {strides = array<i32>} : memref<1x16x96xf32, #tpu.memory_space<vmem>>, vector<1x16x96xf32>,
    %cst_32 = arith.constant 0.333333343 : f32
    %70 = vector.broadcast %cst_32 : f32 to vector<16x32xf32>
    %71 = arith.mulf %47, %70 : vector<16x32xf32>
    %c0_33 = arith.constant 0 : index
    %c0_34 = arith.constant 0 : index
    %c0_35 = arith.constant 0 : index
    %72 = vector.load %arg6[%c0_33, %c0_34, %c0_35] : memref<1x16x32xf32, #tpu.memory_space<vmem>>, vector<1x16x32xf32>
    %73 = vector.shape_cast %72 : vector<1x16x32xf32> to vector<16x32xf32>
    %74 = vector.shape_cast %71 : vector<16x32xf32> to vector<1x16x32xf32>
    tpu.vector_store %arg6[%c0_33, %c0_34, %c0_35], %74 {strides = array<i32>} : memref<1x16x32xf32, #tpu.memory_space<vmem>>, vector<1x16x32xf32>,
    return
  }
  func.func @transform_0(%arg0: i32) -> (i32, i32, i32) {
    %c0_i32 = arith.constant 0 : i32
    %c0_i32_0 = arith.constant 0 : i32
    %c0_i32_1 = arith.constant 0 : i32
    return %arg0, %c0_i32, %c0_i32_0 : i32, i32, i32
  }
  func.func @transform_1(%arg0: i32) -> (i32, i32) {
    %c0_i32 = arith.constant 0 : i32
    %c0_i32_0 = arith.constant 0 : i32
    %c0_i32_1 = arith.constant 0 : i32
    return %c0_i32, %c0_i32_0 : i32, i32
  }
  func.func @transform_2(%arg0: i32) -> (i32, i32) {
    %c0_i32 = arith.constant 0 : i32
    %c0_i32_0 = arith.constant 0 : i32
    %c0_i32_1 = arith.constant 0 : i32
    return %c0_i32, %c0_i32_0 : i32, i32
  }
  func.func @transform_3(%arg0: i32) -> (i32, i32) {
    %c0_i32 = arith.constant 0 : i32
    %c0_i32_0 = arith.constant 0 : i32
    %c0_i32_1 = arith.constant 0 : i32
    return %c0_i32, %c0_i32_0 : i32, i32
  }
  func.func @transform_4(%arg0: i32) -> (i32, i32, i32) {
    %c0_i32 = arith.constant 0 : i32
    %c0_i32_0 = arith.constant 0 : i32
    %c0_i32_1 = arith.constant 0 : i32
    return %arg0, %c0_i32, %c0_i32_0 : i32, i32, i32
  }
  func.func @transform_5(%arg0: i32) -> (i32, i32, i32) {
    %c0_i32 = arith.constant 0 : i32
    %c0_i32_0 = arith.constant 0 : i32
    %c0_i32_1 = arith.constant 0 : i32
    return %arg0, %c0_i32, %c0_i32_0 : i32, i32, i32
  }
}

</mosaic_0001>

<llo_original>
// kernel: attention_forward.1
$region0: #{attention_forward.1}
  #allocation0 [shape = 'u32[]', space=smem, size = 0x4, offset = 0x4, fixed_abs, tag = 'smem constant byte address 0x4 - core index']
  #allocation1 [shape = 'u32[72,128]{1,0:T(1,128)}', space=vmem, size = 0x9000, scoped, tag = 'internal scratch']
  #allocation2 [shape = 'f32[16,96]{1,0:T(8,128)}', space=vmem, size = 0x2000, scoped, tag = 'scratch operand']
  %s0 = inlined_call_operand.hbm [shape: f32[2,16,96], index: 0, kind: input, shape index: {}]
  %s1 = inlined_call_operand.hbm [shape: f32[96,288], index: 1, kind: input, shape index: {}]
  %s2 = inlined_call_operand.hbm [shape: f32[96,96], index: 2, kind: input, shape index: {}]
  %s3 = inlined_call_operand.vmem [shape: f32[1,96], index: 3, kind: input, shape index: {}]
  %s4 = inlined_call_operand.hbm [shape: f32[2,16,96], index: 4, kind: output, shape index: {0}]
  %s5 = inlined_call_operand.hbm [shape: f32[2,16,32], index: 5, kind: output, shape index: {1}]
  %6 = xla_tuple %s4, %s5
  %s7 = sld [smem:[#allocation0]]
  $region69: #{attention_forward.1} parent=0
    _
  %s9 = ssub.s32 1, %s7
  %s10 = scalar_select 0, %s9, %s7
  $region1: #{attention_forward.1} parent=0
    #allocation3 [shape = 'u8[16384]{0}', space=vmem, size = 0x4000, scoped, tag = 'input window, operand 0']
    #allocation4 [shape = 's32[2]{0}', space=sflag, size = 0x8, scoped, tag = 'scoped memory for attention_forward.1']
    #allocation5 [shape = 's32[2]{0}', space=sflag, size = 0x8, scoped, tag = 'scoped memory for attention_forward.1']
    #allocation6 [shape = 'u8[147456]{0}', space=vmem, size = 0x24000, scoped, tag = 'input window, operand 1, single buffered']
    #allocation7 [shape = 's32[1]{0}', space=sflag, size = 0x4, scoped, tag = 'scoped memory for attention_forward.1']
    #allocation8 [shape = 'u8[49152]{0}', space=vmem, size = 0xc000, scoped, tag = 'input window, operand 2, single buffered']
    #allocation9 [shape = 'u8[16384]{0}', space=vmem, size = 0x4000, scoped, tag = 'output window, operand 0']
    #allocation10 [shape = 'u8[16384]{0}', space=vmem, size = 0x4000, scoped, tag = 'output window, operand 1']
    #allocation11 [shape = 's32[2]{0}', space=sflag, size = 0x8, scoped, tag = 'scoped memory for attention_forward.1']
    %11 = vsyncpa [#allocation4], 0
    %s12 = scalar_lea.sflag [#allocation4], 1
    %13 = vsyncpa %s12, 0
    %14 = vsyncpa [#allocation7], 0
    %15 = vsyncpa [#allocation5], 0
    %s16 = scalar_lea.sflag [#allocation5], 1
    %17 = vsyncpa %s16, 0
    %18 = vsyncpa [#allocation11], 0
    %s19 = scalar_lea.sflag [#allocation11], 1
    %20 = vsyncpa %s19, 0
    loop: start=0, step=1, limit=4
    $region2: #{attention_forward.1} parent=1 // loop_pre_header
      _
    $region3: #{attention_forward.1} parent=1 // loop_header
      %s22 = sphi 0, %s26
      %p23 = scmp.ge.s32.totalorder %s22, 4
      %s32 = sphi 0, %s34
      %s35 = sphi 0, %s32
      %s36 = sphi 0, %s35
      %s52 = sphi 0, %s36
      %s56 = sphi 0, %s56
      %s58 = sphi 0, %s56
      %s59 = sphi 0, %s58
      %s73 = sphi 0, %s59
      %s77 = sphi 0, %s77
      %s79 = sphi 0, %s77
      %s80 = sphi 0, %s79
      %s94 = sphi 0, %s80
      %s98 = sphi 0, %s98
      %s100 = sphi 0, %s98
      %s101 = sphi 0, %s100
      %s115 = sphi 0, %s101
      %s121 = sphi 0, %s123
      %s124 = sphi 0, %s121
      %s125 = sphi 0, %s124
      %s141 = sphi 0, %s125
      %s147 = sphi 0, %s149
      %s150 = sphi 0, %s147
      %s151 = sphi 0, %s150
      %s167 = sphi 0, %s151
    $region4: #{attention_forward.1} parent=1 // loop_header_branch
      %25 = sbr.rel (%p23) target = $region8
    $region5: #{attention_forward.1} parent=1 // loop_body
      %s27 = ssub.s32 %s22, 1
      %s28 = ssub.s32 %s22, 2
      %s29 = sadd.s32 %s22, 1
      %s30 = ssub.s32 %s22, %s29
      %p31 = scmp.eq.s32.totalorder %s30, 0
      %s33 = sadd.s32 %s32, 1
      %s34 = scalar_select %p31, %s32, %s33
      %p37 = pneg %p31
      %p38 = scmp.eq.s32.totalorder %s22, 1
      %p39 = por %p37, %p38
      %p40 = scmp.ne.s32.totalorder %s32, %s35
      %p41 = scmp.eq.s32.totalorder %s22, 0
      %p42 = por %p40, %p41
      %p43 = scmp.ne.s32.totalorder %s32, %s35
      %p44 = scmp.eq.s32.totalorder %s27, 1
      %p45 = por %p43, %p44
      %p46 = scmp.ne.s32.totalorder %s35, %s36
      %p47 = scmp.eq.s32.totalorder %s27, 0
      %p48 = por %p46, %p47
      %p49 = scmp.ne.s32.totalorder %s35, %s36
      %p50 = scmp.eq.s32.totalorder %s28, 1
      %p51 = por %p49, %p50
      %p53 = scmp.ne.s32.totalorder %s36, %s52
      %p54 = scmp.eq.s32.totalorder %s28, 0
      %p55 = por %p53, %p54
      %s57 = sadd.s32 %s56, 1
      %p60 = scmp.eq.s32.totalorder %s22, 1
      %p61 = scmp.ne.s32.totalorder %s56, %s58
      %p62 = scmp.eq.s32.totalorder %s22, 0
      %p63 = por %p61, %p62
      %p64 = scmp.ne.s32.totalorder %s56, %s58
      %p65 = scmp.eq.s32.totalorder %s27, 1
      %p66 = por %p64, %p65
      %p67 = scmp.ne.s32.totalorder %s58, %s59
      %p68 = scmp.eq.s32.totalorder %s27, 0
      %p69 = por %p67, %p68
      %p70 = scmp.ne.s32.totalorder %s58, %s59
      %p71 = scmp.eq.s32.totalorder %s28, 1
      %p72 = por %p70, %p71
      %p74 = scmp.ne.s32.totalorder %s59, %s73
      %p75 = scmp.eq.s32.totalorder %s28, 0
      %p76 = por %p74, %p75
      %s78 = sadd.s32 %s77, 1
      %p81 = scmp.eq.s32.totalorder %s22, 1
      %p82 = scmp.ne.s32.totalorder %s77, %s79
      %p83 = scmp.eq.s32.totalorder %s22, 0
      %p84 = por %p82, %p83
      %p85 = scmp.ne.s32.totalorder %s77, %s79
      %p86 = scmp.eq.s32.totalorder %s27, 1
      %p87 = por %p85, %p86
      %p88 = scmp.ne.s32.totalorder %s79, %s80
      %p89 = scmp.eq.s32.totalorder %s27, 0
      %p90 = por %p88, %p89
      %p91 = scmp.ne.s32.totalorder %s79, %s80
      %p92 = scmp.eq.s32.totalorder %s28, 1
      %p93 = por %p91, %p92
      %p95 = scmp.ne.s32.totalorder %s80, %s94
      %p96 = scmp.eq.s32.totalorder %s28, 0
      %p97 = por %p95, %p96
      %s99 = sadd.s32 %s98, 1
      %p102 = scmp.eq.s32.totalorder %s22, 1
      %p103 = scmp.ne.s32.totalorder %s98, %s100
      %p104 = scmp.eq.s32.totalorder %s22, 0
      %p105 = por %p103, %p104
      %p106 = scmp.ne.s32.totalorder %s98, %s100
      %p107 = scmp.eq.s32.totalorder %s27, 1
      %p108 = por %p106, %p107
      %p109 = scmp.ne.s32.totalorder %s100, %s101
      %p110 = scmp.eq.s32.totalorder %s27, 0
      %p111 = por %p109, %p110
      %p112 = scmp.ne.s32.totalorder %s100, %s101
      %p113 = scmp.eq.s32.totalorder %s28, 1
      %p114 = por %p112, %p113
      %p116 = scmp.ne.s32.totalorder %s101, %s115
      %p117 = scmp.eq.s32.totalorder %s28, 0
      %p118 = por %p116, %p117
      %s119 = ssub.s32 %s22, %s29
      %p120 = scmp.eq.s32.totalorder %s119, 0
      %s122 = sadd.s32 %s121, 1
      %s123 = scalar_select %p120, %s121, %s122
      %p126 = pneg %p120
      %p127 = scmp.eq.s32.totalorder %s22, 1
      %p128 = por %p126, %p127
      %p129 = scmp.ne.s32.totalorder %s121, %s124
      %p130 = scmp.eq.s32.totalorder %s22, 0
      %p131 = por %p129, %p130
      %p132 = scmp.ne.s32.totalorder %s121, %s124
      %p133 = scmp.eq.s32.totalorder %s27, 1
      %p134 = por %p132, %p133
      %p135 = scmp.ne.s32.totalorder %s124, %s125
      %p136 = scmp.eq.s32.totalorder %s27, 0
      %p137 = por %p135, %p136
      %p138 = scmp.ne.s32.totalorder %s124, %s125
      %p139 = scmp.eq.s32.totalorder %s28, 1
      %p140 = por %p138, %p139
      %p142 = scmp.ne.s32.totalorder %s125, %s141
      %p143 = scmp.eq.s32.totalorder %s28, 0
      %p144 = por %p142, %p143
      %s145 = ssub.s32 %s22, %s29
      %p146 = scmp.eq.s32.totalorder %s145, 0
      %s148 = sadd.s32 %s147, 1
      %s149 = scalar_select %p146, %s147, %s148
      %p152 = pneg %p146
      %p153 = scmp.eq.s32.totalorder %s22, 1
      %p154 = por %p152, %p153
      %p155 = scmp.ne.s32.totalorder %s147, %s150
      %p156 = scmp.eq.s32.totalorder %s22, 0
      %p157 = por %p155, %p156
      %p158 = scmp.ne.s32.totalorder %s147, %s150
      %p159 = scmp.eq.s32.totalorder %s27, 1
      %p160 = por %p158, %p159
      %p161 = scmp.ne.s32.totalorder %s150, %s151
      %p162 = scmp.eq.s32.totalorder %s27, 0
      %p163 = por %p161, %p162
      %p164 = scmp.ne.s32.totalorder %s150, %s151
      %p165 = scmp.eq.s32.totalorder %s28, 1
      %p166 = por %p164, %p165
      %p168 = scmp.ne.s32.totalorder %s151, %s167
      %p169 = scmp.eq.s32.totalorder %s28, 0
      %p170 = por %p168, %p169
      %p171 = scmp.le.s32.totalorder 1, %s22
      %p172 = scmp.lt.s32.totalorder %s22, 3
      %p173 = pnand %p171, %p172
      %p174 = pneg %p173
      // Predicated region
      $region9: #{attention_forward.1} parent=5 // pred_check
        _
      $region10: #{attention_forward.1} parent=5 // pred_check_branch
        %176 = sbr.rel (%p173) target = $region12
      $region11: #{attention_forward.1} parent=5 // pred_region
        %s177 = ssub.s32 %s22, 1
        // Predicated region
        $region13: #{attention_forward.1} parent=11 // pred_check
          %p178 = pneg %p69
        $region14: #{attention_forward.1} parent=11 // pred_check_branch
          %180 = sbr.rel (%p178) target = $region16
        $region15: #{attention_forward.1} parent=11 // pred_region
          %182 = vsyncadd [#allocation7], 0
          %s183 = sshll.u32 %s1, 4
          %s184 = int_to_ptr.hbm [resolvable:$true] %s183
          %s185 = sshll.u32 [#allocation6], 4
          %s186 = int_to_ptr.vmem [resolvable:$true] %s185
          %191 = dma.hbm_to_vmem [thread:$0]  %s184, 4608, %s186, [#allocation7], 384, 384, 24
        $region16: #{attention_forward.1} parent=11 // pred_fallthru
          _
        // Predicated region
        $region17: #{attention_forward.1} parent=11 // pred_check
          %p192 = pneg %p90
        $region18: #{attention_forward.1} parent=11 // pred_check_branch
          %194 = sbr.rel (%p192) target = $region20
        $region19: #{attention_forward.1} parent=11 // pred_region
          %196 = vsyncadd [#allocation7], 0
          %s197 = sshll.u32 %s2, 4
          %s198 = int_to_ptr.hbm [resolvable:$true] %s197
          %s199 = sshll.u32 [#allocation8], 4
          %s200 = int_to_ptr.vmem [resolvable:$true] %s199
          %205 = dma.hbm_to_vmem [thread:$0]  %s198, 1536, %s200, [#allocation7], 128, 128, 8
        $region20: #{attention_forward.1} parent=11 // pred_fallthru
          _
        // Predicated region
        $region21: #{attention_forward.1} parent=11 // pred_check
          %p206 = pneg %p111
        $region22: #{attention_forward.1} parent=11 // pred_check_branch
          %208 = sbr.rel (%p206) target = $region24
        $region23: #{attention_forward.1} parent=11 // pred_region
          _
        $region24: #{attention_forward.1} parent=11 // pred_fallthru
          _
      $region12: #{attention_forward.1} parent=5 // pred_fallthru
        _
      %p209 = scmp.lt.s32.totalorder %s22, 2
      // Predicated region
      $region25: #{attention_forward.1} parent=5 // pred_check
        %p210 = pneg %p209
      $region26: #{attention_forward.1} parent=5 // pred_check_branch
        %212 = sbr.rel (%p210) target = $region28
      $region27: #{attention_forward.1} parent=5 // pred_region
        // Predicated region
        $region29: #{attention_forward.1} parent=27 // pred_check
          %p213 = pneg %p42
        $region30: #{attention_forward.1} parent=27 // pred_check_branch
          %215 = sbr.rel (%p213) target = $region32
        $region31: #{attention_forward.1} parent=27 // pred_region
          %s216 = sand.u32 %s32, 1
          %s217 = scalar_lea.sflag [#allocation4], %s216
          %s218 = sand.u32 %s32, 1
          %s219 = smul.addr %s218, 16
          %s220 = scalar_lea.vmem [#allocation3], %s219
          %222 = vsyncadd %s217, 0
          %s223 = smul.addr %s22, 2
          %s224 = smul.addr %s223, 8
          %s225 = scalar_lea.hbm %s0, %s224
          %s226 = sshll.u32 %s225, 4
          %s227 = int_to_ptr.hbm [resolvable:$true] %s226
          %s228 = sshll.u32 %s220, 4
          %s229 = int_to_ptr.vmem [resolvable:$true] %s228
          %234 = dma.hbm_to_vmem [thread:$0]  %s227, 256, %s229, %s217, 128, 128, 8
        $region32: #{attention_forward.1} parent=27 // pred_fallthru
          _
      $region28: #{attention_forward.1} parent=5 // pred_fallthru
        _
      %p235 = scmp.le.s32.totalorder 1, %s22
      %p236 = scmp.lt.s32.totalorder %s22, 3
      %p237 = pnand %p235, %p236
      %p238 = pneg %p237
      // Predicated region
      $region33: #{attention_forward.1} parent=5 // pred_check
        _
      $region34: #{attention_forward.1} parent=5 // pred_check_branch
        %240 = sbr.rel (%p237) target = $region36
      $region35: #{attention_forward.1} parent=5 // pred_region
        %s241 = ssub.s32 %s22, 1
        %s242 = sand.u32 %s35, 1
        %s243 = scalar_lea.sflag [#allocation4], %s242
        %s244 = sand.u32 %s35, 1
        %s245 = smul.addr %s244, 16
        %s246 = scalar_lea.vmem [#allocation3], %s245
        // Predicated region
        $region37: #{attention_forward.1} parent=35 // pred_check
          %p247 = pneg %p48
        $region38: #{attention_forward.1} parent=35 // pred_check_branch
          %249 = sbr.rel (%p247) target = $region40
        $region39: #{attention_forward.1} parent=35 // pred_region
          %251 = dma.done %s243, 256
        $region40: #{attention_forward.1} parent=35 // pred_fallthru
          _
        // Predicated region
        $region41: #{attention_forward.1} parent=35 // pred_check
          %p252 = pneg %p69
        $region42: #{attention_forward.1} parent=35 // pred_check_branch
          %254 = sbr.rel (%p252) target = $region44
        $region43: #{attention_forward.1} parent=35 // pred_region
          %256 = dma.done [#allocation7], 4608
        $region44: #{attention_forward.1} parent=35 // pred_fallthru
          _
        // Predicated region
        $region45: #{attention_forward.1} parent=35 // pred_check
          %p257 = pneg %p90
        $region46: #{attention_forward.1} parent=35 // pred_check_branch
          %259 = sbr.rel (%p257) target = $region48
        $region47: #{attention_forward.1} parent=35 // pred_region
          %261 = dma.done [#allocation7], 1536
        $region48: #{attention_forward.1} parent=35 // pred_fallthru
          _
        %s262 = sand.u32 %s35, 1
        %s263 = scalar_lea.sflag [#allocation4], %s262
        %s264 = sand.u32 %s35, 1
        %s265 = smul.addr %s264, 16
        %s266 = scalar_lea.vmem [#allocation3], %s265
        %p267 = pneg %p48
        %p268 = pneg %p45
        %p269 = pneg %p69
        %p270 = pneg %p66
        %p271 = pneg %p90
        %p272 = pneg %p87
        %p273 = pneg %p111
        %p274 = pneg %p108
        %p275 = pneg %p137
        %p276 = pneg %p134
        %s277 = sand.u32 %s124, 1
        %s278 = scalar_lea.sflag [#allocation5], %s277
        %s279 = sand.u32 %s124, 1
        %s280 = smul.addr %s279, 16
        %s281 = scalar_lea.vmem [#allocation9], %s280
        %p282 = pneg %p163
        %p283 = pneg %p160
        %s284 = sand.u32 %s150, 1
        %s285 = scalar_lea.sflag [#allocation11], %s284
        %s286 = sand.u32 %s150, 1
        %s287 = smul.addr %s286, 16
        %s288 = scalar_lea.vmem [#allocation10], %s287
        %v289 = vld [vmem:[%s246] sm:$0xff]
        %v290 = vld [vmem:[%s246 + $0x8] sm:$0xff]
        %v291 = vld [vmem:[#allocation6] sm:$0xff]
        %v292 = vld [vmem:[#allocation6 + $0x8] sm:$0xff]
        %v293 = vld [vmem:[#allocation6 + $0x10] sm:$0xff]
        %v294 = vld [vmem:[#allocation6 + $0x18] sm:$0xff]
        %v295 = vld [vmem:[#allocation6 + $0x20] sm:$0xff]
        %v296 = vld [vmem:[#allocation6 + $0x28] sm:$0xff]
        %v297 = vld [vmem:[#allocation6 + $0x30] sm:$0xff]
        %v298 = vld [vmem:[#allocation6 + $0x38] sm:$0xff]
        %v299 = vld [vmem:[#allocation6 + $0x40] sm:$0xff]
        %v300 = vld [vmem:[#allocation6 + $0x48] sm:$0xff]
        %v301 = vld [vmem:[#allocation6 + $0x50] sm:$0xff]
        %v302 = vld [vmem:[#allocation6 + $0x58] sm:$0xff]
        %v303 = vld [vmem:[#allocation6 + $0x60] sm:$0xff]
        %v304 = vld [vmem:[#allocation6 + $0x68] sm:$0xff]
        %v305 = vld [vmem:[#allocation6 + $0x70] sm:$0xff]
        %v306 = vld [vmem:[#allocation6 + $0x78] sm:$0xff]
        %v307 = vld [vmem:[#allocation6 + $0x80] sm:$0xff]
        %v308 = vld [vmem:[#allocation6 + $0x88] sm:$0xff]
        %v309 = vld [vmem:[#allocation6 + $0x90] sm:$0xff]
        %v310 = vld [vmem:[#allocation6 + $0x98] sm:$0xff]
        %v311 = vld [vmem:[#allocation6 + $0xa0] sm:$0xff]
        %v312 = vld [vmem:[#allocation6 + $0xa8] sm:$0xff]
        %v313 = vld [vmem:[#allocation6 + $0xb0] sm:$0xff]
        %v314 = vld [vmem:[#allocation6 + $0xb8] sm:$0xff]
        %v315 = vld [vmem:[#allocation6 + $0xc0] sm:$0xff]
        %v316 = vld [vmem:[#allocation6 + $0xc8] sm:$0xff]
        %v317 = vld [vmem:[#allocation6 + $0xd0] sm:$0xff]
        %v318 = vld [vmem:[#allocation6 + $0xd8] sm:$0xff]
        %v319 = vld [vmem:[#allocation6 + $0xe0] sm:$0xff]
        %v320 = vld [vmem:[#allocation6 + $0xe8] sm:$0xff]
        %v321 = vld [vmem:[#allocation6 + $0xf0] sm:$0xff]
        %v322 = vld [vmem:[#allocation6 + $0xf8] sm:$0xff]
        %v323 = vld [vmem:[#allocation6 + $0x100] sm:$0xff]
        %v324 = vld [vmem:[#allocation6 + $0x108] sm:$0xff]
        %v325 = vld [vmem:[#allocation6 + $0x110] sm:$0xff]
        %v326 = vld [vmem:[#allocation6 + $0x118] sm:$0xff]
        %vm327 = vcmask 785408
        %v329 = vsel %vm327, %v289, 0
        %v332 = vsel %vm327, %v290, 0
        %334 = vmatpush.msra.mxu0 0.0
        %335 = vmatpush.msra.mxu0 0.0
        %336 = vmatpush.msra.mxu0 0.0
        %337 = vmatpush.msra.mxu0 0.0
        %338 = vmatpush.msra.mxu0 %v324
        %339 = vmatpush.msra.mxu0 %v321
        %340 = vmatpush.msra.mxu0 %v318
        %341 = vmatpush.msra.mxu0 %v315
        %342 = vmatpush.msra.mxu0 %v312
        %343 = vmatpush.msra.mxu0 %v309
        %344 = vmatpush.msra.mxu0 %v306
        %345 = vmatpush.msra.mxu0 %v303
        %346 = vmatpush.msra.mxu0 %v300
        %347 = vmatpush.msra.mxu0 %v297
        %348 = vmatpush.msra.mxu0 %v294
        %349 = vmatpush.msra.mxu0 %v291
        %350 = vmatmul.f32.gmra.mxu0 %v329
        %v351 = vpop.f32.mrf.mxu0
        %v352 = vadd.f32 0.0, %v351
        %353 = vmatmul.f32.gmra.mxu0 %v332
        %v354 = vpop.f32.mrf.mxu0
        %v355 = vadd.f32 0.0, %v354
        %356 = vdwg.mxu0
        %357 = vmatpush.msra.mxu0 0.0
        %358 = vmatpush.msra.mxu0 0.0
        %359 = vmatpush.msra.mxu0 0.0
        %360 = vmatpush.msra.mxu0 0.0
        %361 = vmatpush.msra.mxu0 %v325
        %362 = vmatpush.msra.mxu0 %v322
        %363 = vmatpush.msra.mxu0 %v319
        %364 = vmatpush.msra.mxu0 %v316
        %365 = vmatpush.msra.mxu0 %v313
        %366 = vmatpush.msra.mxu0 %v310
        %367 = vmatpush.msra.mxu0 %v307
        %368 = vmatpush.msra.mxu0 %v304
        %369 = vmatpush.msra.mxu0 %v301
        %370 = vmatpush.msra.mxu0 %v298
        %371 = vmatpush.msra.mxu0 %v295
        %372 = vmatpush.msra.mxu0 %v292
        %373 = vmatmul.f32.gmra.mxu0 %v329
        %v374 = vpop.f32.mrf.mxu0
        %v375 = vadd.f32 0.0, %v374
        %376 = vmatmul.f32.gmra.mxu0 %v332
        %v377 = vpop.f32.mrf.mxu0
        %v378 = vadd.f32 0.0, %v377
        %379 = vdwg.mxu0
        %380 = vmatpush.msra.mxu0 0.0
        %381 = vmatpush.msra.mxu0 0.0
        %382 = vmatpush.msra.mxu0 0.0
        %383 = vmatpush.msra.mxu0 0.0
        %384 = vmatpush.msra.mxu0 %v326
        %385 = vmatpush.msra.mxu0 %v323
        %386 = vmatpush.msra.mxu0 %v320
        %387 = vmatpush.msra.mxu0 %v317
        %388 = vmatpush.msra.mxu0 %v314
        %389 = vmatpush.msra.mxu0 %v311
        %390 = vmatpush.msra.mxu0 %v308
        %391 = vmatpush.msra.mxu0 %v305
        %392 = vmatpush.msra.mxu0 %v302
        %393 = vmatpush.msra.mxu0 %v299
        %394 = vmatpush.msra.mxu0 %v296
        %395 = vmatpush.msra.mxu0 %v293
        %396 = vmatmul.f32.gmra.mxu0 %v329
        %v397 = vpop.f32.mrf.mxu0
        %v398 = vadd.f32 0.0, %v397
        %399 = vmatmul.f32.gmra.mxu0 %v332
        %v400 = vpop.f32.mrf.mxu0
        %v401 = vadd.f32 0.0, %v400
        %402 = vdwg.mxu0
        %v403 = vmul.f32 %v352, 0.17677669
        %v404 = vmul.f32 %v355, 0.17677669
        %v405 = vadd.f32 %v352, 0.0
        %v406 = vadd.f32 %v355, 0.0
        %409 = vrot.lane.b32.xlu0 %v352, 32
        %v410 = vpop.permute.xlu0 %409
        %411 = vrot.lane.b32.xlu0 %v355, 32
        %v412 = vpop.permute.xlu0 %411
        %vm413 = vcmask 261120
        %v415 = vsel %vm413, %v403, 0
        %v418 = vsel %vm413, %v404, 0
        %v420 = vsel %vm413, %v410, 0
        %v422 = vsel %vm413, %v412, 0
        %424 = vmatpush.xpose.msra.mxu0 0.0
        %425 = vmatpush.xpose.msra.mxu0 0.0
        %426 = vmatpush.xpose.msra.mxu0 0.0
        %427 = vmatpush.xpose.msra.mxu0 0.0
        %428 = vmatpush.xpose.msra.mxu0 0.0
        %429 = vmatpush.xpose.msra.mxu0 0.0
        %430 = vmatpush.xpose.msra.mxu0 0.0
        %431 = vmatpush.xpose.msra.mxu0 0.0
        %432 = vmatpush.xpose.msra.mxu0 0.0
        %433 = vmatpush.xpose.msra.mxu0 0.0
        %434 = vmatpush.xpose.msra.mxu0 0.0
        %435 = vmatpush.xpose.msra.mxu0 0.0
        %436 = vmatpush.xpose.msra.mxu0 0.0
        %437 = vmatpush.xpose.msra.mxu0 0.0
        %438 = vmatpush.xpose.msra.mxu0 %v422
        %439 = vmatpush.xpose.msra.mxu0 %v420
        %440 = vmatmul.f32.gmra.mxu0 %v415
        %v441 = vpop.f32.mrf.mxu0
        %v442 = vadd.f32 0.0, %v441
        %443 = vmatmul.f32.gmra.mxu0 %v418
        %v444 = vpop.f32.mrf.mxu0
        %v445 = vadd.f32 0.0, %v444
        %446 = vdwg.mxu0
        %vm447 = vcmask 130048
        %v448 = vsel %vm447, %v442, -inf
        %449 = vmax.xlane.f32.xlu0 %v448
        %v450 = vpop.xlane.xlu0 %449
        %v451 = vsel %vm447, %v445, -inf
        %452 = vmax.xlane.f32.xlu0 %v451
        %v453 = vpop.xlane.xlu0 %452
        %v454 = vsub.f32 %v442, %v450
        %v455 = vsub.f32 %v445, %v453
        %v456 = vmul.f32 %v454, 1.442695
        %v457 = vpow.pop %v456
        %v458 = vmul.f32 %v455, 1.442695
        %v459 = vpow.pop %v458
        %v460 = vsel %vm447, %v457, 0.0
        %461 = vadd.xlane.f32.xlu0 %v460
        %v462 = vpop.xlane.xlu0 %461
        %v463 = vsel %vm447, %v459, 0.0
        %464 = vadd.xlane.f32.xlu0 %v463
        %v465 = vpop.xlane.xlu0 %464
        %468 = vrot.lane.b32.xlu0 %v375, 64
        %v469 = vpop.permute.xlu0 %468
        %470 = vrot.lane.b32.xlu0 %v378, 64
        %v471 = vpop.permute.xlu0 %470
        %v475 = vsel %vm447, %v457, 0
        %v478 = vsel %vm447, %v459, 0
        %480 = vmatpush.msra.mxu0 0.0
        %481 = vmatpush.msra.mxu0 0.0
        %482 = vmatpush.msra.mxu0 0.0
        %483 = vmatpush.msra.mxu0 0.0
        %484 = vmatpush.msra.mxu0 0.0
        %485 = vmatpush.msra.mxu0 0.0
        %486 = vmatpush.msra.mxu0 0.0
        %487 = vmatpush.msra.mxu0 0.0
        %488 = vmatpush.msra.mxu0 0.0
        %489 = vmatpush.msra.mxu0 0.0
        %490 = vmatpush.msra.mxu0 0.0
        %491 = vmatpush.msra.mxu0 0.0
        %492 = vmatpush.msra.mxu0 0.0
        %493 = vmatpush.msra.mxu0 0.0
        %494 = vmatpush.msra.mxu0 %v471
        %495 = vmatpush.msra.mxu0 %v469
        %496 = vmatmul.f32.gmra.mxu0 %v475
        %v497 = vpop.f32.mrf.mxu0
        %v498 = vadd.f32 0.0, %v497
        %499 = vmatmul.f32.gmra.mxu0 %v478
        %v500 = vpop.f32.mrf.mxu0
        %v501 = vadd.f32 0.0, %v500
        %502 = vdwg.mxu0
        %v503 = vrcp.pop %v462
        %v504 = vrcp.pop %v465
        %v505 = vmul.f32 %v498, %v503
        %v506 = vmul.f32 %v501, %v504
        %507 = vst.msk [vmem:[#allocation2] sm:$0xff] %vm413, %v505
        %508 = vst.msk [vmem:[#allocation2 + $0x8] sm:$0xff] %vm413, %v506
        %509 = vrot.lane.b32.xlu0 %v375, 96
        %v510 = vpop.permute.xlu0 %509
        %511 = vrot.lane.b32.xlu0 %v378, 96
        %v512 = vpop.permute.xlu0 %511
        %v515 = vadd.f32 %v405, %v510
        %v516 = vadd.f32 %v406, %v512
        %517 = vrot.lane.b32.xlu0 %v403, 96
        %v518 = vpop.permute.xlu0 %517
        %519 = vrot.lane.b32.xlu0 %v404, 96
        %v520 = vpop.permute.xlu0 %519
        %v521 = vsel %vm413, %v518, 0
        %v523 = vsel %vm413, %v520, 0
        %v525 = vsel %vm413, %v375, 0
        %v527 = vsel %vm413, %v378, 0
        %529 = vmatpush.xpose.msra.mxu0 0.0
        %530 = vmatpush.xpose.msra.mxu0 0.0
        %531 = vmatpush.xpose.msra.mxu0 0.0
        %532 = vmatpush.xpose.msra.mxu0 0.0
        %533 = vmatpush.xpose.msra.mxu0 0.0
        %534 = vmatpush.xpose.msra.mxu0 0.0
        %535 = vmatpush.xpose.msra.mxu0 0.0
        %536 = vmatpush.xpose.msra.mxu0 0.0
        %537 = vmatpush.xpose.msra.mxu0 0.0
        %538 = vmatpush.xpose.msra.mxu0 0.0
        %539 = vmatpush.xpose.msra.mxu0 0.0
        %540 = vmatpush.xpose.msra.mxu0 0.0
        %541 = vmatpush.xpose.msra.mxu0 0.0
        %542 = vmatpush.xpose.msra.mxu0 0.0
        %543 = vmatpush.xpose.msra.mxu0 %v527
        %544 = vmatpush.xpose.msra.mxu0 %v525
        %545 = vmatmul.f32.gmra.mxu0 %v521
        %v546 = vpop.f32.mrf.mxu0
        %v547 = vadd.f32 0.0, %v546
        %548 = vmatmul.f32.gmra.mxu0 %v523
        %v549 = vpop.f32.mrf.mxu0
        %v550 = vadd.f32 0.0, %v549
        %551 = vdwg.mxu0
        %v552 = vsel %vm447, %v547, -inf
        %553 = vmax.xlane.f32.xlu0 %v552
        %v554 = vpop.xlane.xlu0 %553
        %v555 = vsel %vm447, %v550, -inf
        %556 = vmax.xlane.f32.xlu0 %v555
        %v557 = vpop.xlane.xlu0 %556
        %v558 = vsub.f32 %v547, %v554
        %v559 = vsub.f32 %v550, %v557
        %v560 = vmul.f32 %v558, 1.442695
        %v561 = vpow.pop %v560
        %v562 = vmul.f32 %v559, 1.442695
        %v563 = vpow.pop %v562
        %v564 = vsel %vm447, %v561, 0.0
        %565 = vadd.xlane.f32.xlu0 %v564
        %v566 = vpop.xlane.xlu0 %565
        %v567 = vsel %vm447, %v563, 0.0
        %568 = vadd.xlane.f32.xlu0 %v567
        %v569 = vpop.xlane.xlu0 %568
        %570 = vrot.lane.b32.xlu0 %v375, 32
        %v571 = vpop.permute.xlu0 %570
        %572 = vrot.lane.b32.xlu0 %v378, 32
        %v573 = vpop.permute.xlu0 %572
        %v577 = vsel %vm447, %v561, 0
        %v580 = vsel %vm447, %v563, 0
        %582 = vmatpush.msra.mxu0 0.0
        %583 = vmatpush.msra.mxu0 0.0
        %584 = vmatpush.msra.mxu0 0.0
        %585 = vmatpush.msra.mxu0 0.0
        %586 = vmatpush.msra.mxu0 0.0
        %587 = vmatpush.msra.mxu0 0.0
        %588 = vmatpush.msra.mxu0 0.0
        %589 = vmatpush.msra.mxu0 0.0
        %590 = vmatpush.msra.mxu0 0.0
        %591 = vmatpush.msra.mxu0 0.0
        %592 = vmatpush.msra.mxu0 0.0
        %593 = vmatpush.msra.mxu0 0.0
        %594 = vmatpush.msra.mxu0 0.0
        %595 = vmatpush.msra.mxu0 0.0
        %596 = vmatpush.msra.mxu0 %v573
        %597 = vmatpush.msra.mxu0 %v571
        %598 = vmatmul.f32.gmra.mxu0 %v577
        %v599 = vpop.f32.mrf.mxu0
        %v600 = vadd.f32 0.0, %v599
        %601 = vmatmul.f32.gmra.mxu0 %v580
        %v602 = vpop.f32.mrf.mxu0
        %v603 = vadd.f32 0.0, %v602
        %604 = vdwg.mxu0
        %v605 = vrcp.pop %v566
        %v606 = vrcp.pop %v569
        %v607 = vmul.f32 %v600, %v605
        %v608 = vmul.f32 %v603, %v606
        %611 = vrot.lane.b32.xlu0 %v607, 32
        %v612 = vpop.permute.xlu0 %611
        %613 = vrot.lane.b32.xlu0 %v608, 32
        %v614 = vpop.permute.xlu0 %613
        %vm617 = vcmask 523520
        %618 = vst.msk [vmem:[#allocation2] sm:$0xff] %vm617, %v612
        %619 = vst.msk [vmem:[#allocation2 + $0x8] sm:$0xff] %vm617, %v614
        %v620 = vadd.f32 %v515, %v469
        %v621 = vadd.f32 %v516, %v471
        %622 = vrot.lane.b32.xlu0 %v403, 64
        %v623 = vpop.permute.xlu0 %622
        %624 = vrot.lane.b32.xlu0 %v404, 64
        %v625 = vpop.permute.xlu0 %624
        %v626 = vsel %vm413, %v623, 0
        %v628 = vsel %vm413, %v625, 0
        %v630 = vsel %vm413, %v510, 0
        %v632 = vsel %vm413, %v512, 0
        %634 = vmatpush.xpose.msra.mxu0 0.0
        %635 = vmatpush.xpose.msra.mxu0 0.0
        %636 = vmatpush.xpose.msra.mxu0 0.0
        %637 = vmatpush.xpose.msra.mxu0 0.0
        %638 = vmatpush.xpose.msra.mxu0 0.0
        %639 = vmatpush.xpose.msra.mxu0 0.0
        %640 = vmatpush.xpose.msra.mxu0 0.0
        %641 = vmatpush.xpose.msra.mxu0 0.0
        %642 = vmatpush.xpose.msra.mxu0 0.0
        %643 = vmatpush.xpose.msra.mxu0 0.0
        %644 = vmatpush.xpose.msra.mxu0 0.0
        %645 = vmatpush.xpose.msra.mxu0 0.0
        %646 = vmatpush.xpose.msra.mxu0 0.0
        %647 = vmatpush.xpose.msra.mxu0 0.0
        %648 = vmatpush.xpose.msra.mxu0 %v632
        %649 = vmatpush.xpose.msra.mxu0 %v630
        %650 = vmatmul.f32.gmra.mxu0 %v626
        %v651 = vpop.f32.mrf.mxu0
        %v652 = vadd.f32 0.0, %v651
        %653 = vmatmul.f32.gmra.mxu0 %v628
        %v654 = vpop.f32.mrf.mxu0
        %v655 = vadd.f32 0.0, %v654
        %656 = vdwg.mxu0
        %v657 = vsel %vm447, %v652, -inf
        %658 = vmax.xlane.f32.xlu0 %v657
        %v659 = vpop.xlane.xlu0 %658
        %v660 = vsel %vm447, %v655, -inf
        %661 = vmax.xlane.f32.xlu0 %v660
        %v662 = vpop.xlane.xlu0 %661
        %v663 = vsub.f32 %v652, %v659
        %v664 = vsub.f32 %v655, %v662
        %v665 = vmul.f32 %v663, 1.442695
        %v666 = vpow.pop %v665
        %v667 = vmul.f32 %v664, 1.442695
        %v668 = vpow.pop %v667
        %v669 = vsel %vm447, %v666, 0.0
        %670 = vadd.xlane.f32.xlu0 %v669
        %v671 = vpop.xlane.xlu0 %670
        %v672 = vsel %vm447, %v668, 0.0
        %673 = vadd.xlane.f32.xlu0 %v672
        %v674 = vpop.xlane.xlu0 %673
        %v676 = vsel %vm447, %v666, 0
        %v679 = vsel %vm447, %v668, 0
        %681 = vmatpush.msra.mxu0 0.0
        %682 = vmatpush.msra.mxu0 0.0
        %683 = vmatpush.msra.mxu0 0.0
        %684 = vmatpush.msra.mxu0 0.0
        %685 = vmatpush.msra.mxu0 0.0
        %686 = vmatpush.msra.mxu0 0.0
        %687 = vmatpush.msra.mxu0 0.0
        %688 = vmatpush.msra.mxu0 0.0
        %689 = vmatpush.msra.mxu0 0.0
        %690 = vmatpush.msra.mxu0 0.0
        %691 = vmatpush.msra.mxu0 0.0
        %692 = vmatpush.msra.mxu0 0.0
        %693 = vmatpush.msra.mxu0 0.0
        %694 = vmatpush.msra.mxu0 0.0
        %695 = vmatpush.msra.mxu0 %v401
        %696 = vmatpush.msra.mxu0 %v398
        %697 = vmatmul.f32.gmra.mxu0 %v676
        %v698 = vpop.f32.mrf.mxu0
        %v699 = vadd.f32 0.0, %v698
        %700 = vmatmul.f32.gmra.mxu0 %v679
        %v701 = vpop.f32.mrf.mxu0
        %v702 = vadd.f32 0.0, %v701
        %703 = vdwg.mxu0
        %v704 = vrcp.pop %v671
        %v705 = vrcp.pop %v674
        %v706 = vmul.f32 %v699, %v704
        %v707 = vmul.f32 %v702, %v705
        %710 = vrot.lane.b32.xlu0 %v706, 64
        %v711 = vpop.permute.xlu0 %710
        %712 = vrot.lane.b32.xlu0 %v707, 64
        %v713 = vpop.permute.xlu0 %712
        %vm716 = vcmask 785920
        %717 = vst.msk [vmem:[#allocation2] sm:$0xff] %vm716, %v711
        %718 = vst.msk [vmem:[#allocation2 + $0x8] sm:$0xff] %vm716, %v713
        %v719 = vld [vmem:[#allocation2] sm:$0xff]
        %v720 = vld [vmem:[#allocation2 + $0x8] sm:$0xff]
        %v721 = vld [vmem:[#allocation8] sm:$0xff]
        %v722 = vld [vmem:[#allocation8 + $0x8] sm:$0xff]
        %v723 = vld [vmem:[#allocation8 + $0x10] sm:$0xff]
        %v724 = vld [vmem:[#allocation8 + $0x18] sm:$0xff]
        %v725 = vld [vmem:[#allocation8 + $0x20] sm:$0xff]
        %v726 = vld [vmem:[#allocation8 + $0x28] sm:$0xff]
        %v727 = vld [vmem:[#allocation8 + $0x30] sm:$0xff]
        %v728 = vld [vmem:[#allocation8 + $0x38] sm:$0xff]
        %v729 = vld [vmem:[#allocation8 + $0x40] sm:$0xff]
        %v730 = vld [vmem:[#allocation8 + $0x48] sm:$0xff]
        %v731 = vld [vmem:[#allocation8 + $0x50] sm:$0xff]
        %v732 = vld [vmem:[#allocation8 + $0x58] sm:$0xff]
        %v733 = vld [vmem:[%s3] sm:$0x1]
        %v735 = vperm.slane %v733, 0
        %v738 = vsel %vm327, %v719, 0
        %v741 = vsel %vm327, %v720, 0
        %743 = vmatpush.msra.mxu0 0.0
        %744 = vmatpush.msra.mxu0 0.0
        %745 = vmatpush.msra.mxu0 0.0
        %746 = vmatpush.msra.mxu0 0.0
        %747 = vmatpush.msra.mxu0 %v732
        %748 = vmatpush.msra.mxu0 %v731
        %749 = vmatpush.msra.mxu0 %v730
        %750 = vmatpush.msra.mxu0 %v729
        %751 = vmatpush.msra.mxu0 %v728
        %752 = vmatpush.msra.mxu0 %v727
        %753 = vmatpush.msra.mxu0 %v726
        %754 = vmatpush.msra.mxu0 %v725
        %755 = vmatpush.msra.mxu0 %v724
        %756 = vmatpush.msra.mxu0 %v723
        %757 = vmatpush.msra.mxu0 %v722
        %758 = vmatpush.msra.mxu0 %v721
        %759 = vmatmul.f32.gmra.mxu0 %v738
        %v760 = vpop.f32.mrf.mxu0
        %v761 = vadd.f32 %v735, %v760
        %762 = vmatmul.f32.gmra.mxu0 %v741
        %v763 = vpop.f32.mrf.mxu0
        %v764 = vadd.f32 %v735, %v763
        %765 = vdwg.mxu0
        %766 = vst.msk [vmem:[%s281] sm:$0xff] %vm327, %v761
        %767 = vst.msk [vmem:[%s281 + $0x8] sm:$0xff] %vm327, %v764
        %v768 = vmul.f32 %v620, 0.33333334
        %v769 = vmul.f32 %v621, 0.33333334
        %772 = vrot.lane.b32.xlu0 %v768, 32
        %v773 = vpop.permute.xlu0 %772
        %774 = vrot.lane.b32.xlu0 %v769, 32
        %v775 = vpop.permute.xlu0 %774
        %778 = vst.msk [vmem:[%s288] sm:$0xff] %vm413, %v773
        %779 = vst.msk [vmem:[%s288 + $0x8] sm:$0xff] %vm413, %v775
        %s780 = sand.u32 %s124, 1
        %s781 = scalar_lea.sflag [#allocation5], %s780
        %s782 = sand.u32 %s124, 1
        %s783 = smul.addr %s782, 16
        %s784 = scalar_lea.vmem [#allocation9], %s783
        %s785 = sand.u32 %s150, 1
        %s786 = scalar_lea.sflag [#allocation11], %s785
        %s787 = sand.u32 %s150, 1
        %s788 = smul.addr %s787, 16
        %s789 = scalar_lea.vmem [#allocation10], %s788
        // Predicated region
        $region49: #{attention_forward.1} parent=35 // pred_check
          %p790 = pneg %p134
        $region50: #{attention_forward.1} parent=35 // pred_check_branch
          %792 = sbr.rel (%p790) target = $region52
        $region51: #{attention_forward.1} parent=35 // pred_region
          %794 = vsyncadd %s781, 0
          %s795 = smul.addr %s27, 2
          %s796 = smul.addr %s795, 8
          %s797 = scalar_lea.hbm %s4, %s796
          %s798 = sshll.u32 %s784, 4
          %s799 = int_to_ptr.vmem [resolvable:$true] %s798
          %s800 = sshll.u32 %s797, 4
          %s801 = int_to_ptr.hbm [resolvable:$true] %s800
          %806 = dma.vmem_to_hbm [thread:$0]  %s799, 256, %s801, %s781, 128, 128, 8
        $region52: #{attention_forward.1} parent=35 // pred_fallthru
          _
        // Predicated region
        $region53: #{attention_forward.1} parent=35 // pred_check
          %p807 = pneg %p160
        $region54: #{attention_forward.1} parent=35 // pred_check_branch
          %809 = sbr.rel (%p807) target = $region56
        $region55: #{attention_forward.1} parent=35 // pred_region
          %811 = vsyncadd %s786, 0
          %s812 = smul.addr %s27, 2
          %s813 = smul.addr %s812, 8
          %s814 = scalar_lea.hbm %s5, %s813
          %s815 = sshll.u32 %s789, 4
          %s816 = int_to_ptr.vmem [resolvable:$true] %s815
          %s817 = sshll.u32 %s814, 4
          %s818 = int_to_ptr.hbm [resolvable:$true] %s817
          %823 = dma.vmem_to_hbm [thread:$0]  %s816, 256, %s818, %s786, 128, 128, 8
        $region56: #{attention_forward.1} parent=35 // pred_fallthru
          _
      $region36: #{attention_forward.1} parent=5 // pred_fallthru
        _
      %p824 = scmp.le.s32.totalorder 2, %s22
      // Predicated region
      $region57: #{attention_forward.1} parent=5 // pred_check
        %p825 = pneg %p824
      $region58: #{attention_forward.1} parent=5 // pred_check_branch
        %827 = sbr.rel (%p825) target = $region60
      $region59: #{attention_forward.1} parent=5 // pred_region
        %s828 = ssub.s32 %s22, 2
        // Predicated region
        $region61: #{attention_forward.1} parent=59 // pred_check
          %p829 = pneg %p140
        $region62: #{attention_forward.1} parent=59 // pred_check_branch
          %831 = sbr.rel (%p829) target = $region64
        $region63: #{attention_forward.1} parent=59 // pred_region
          %s832 = sand.u32 %s125, 1
          %s833 = scalar_lea.sflag [#allocation5], %s832
          %s834 = sand.u32 %s125, 1
          %s835 = smul.addr %s834, 16
          %s836 = scalar_lea.vmem [#allocation9], %s835
          %838 = dma.done %s833, 256
        $region64: #{attention_forward.1} parent=59 // pred_fallthru
          _
        // Predicated region
        $region65: #{attention_forward.1} parent=59 // pred_check
          %p839 = pneg %p166
        $region66: #{attention_forward.1} parent=59 // pred_check_branch
          %841 = sbr.rel (%p839) target = $region68
        $region67: #{attention_forward.1} parent=59 // pred_region
          %s842 = sand.u32 %s151, 1
          %s843 = scalar_lea.sflag [#allocation11], %s842
          %s844 = sand.u32 %s151, 1
          %s845 = smul.addr %s844, 16
          %s846 = scalar_lea.vmem [#allocation10], %s845
          %848 = dma.done %s843, 256
        $region68: #{attention_forward.1} parent=59 // pred_fallthru
          _
      $region60: #{attention_forward.1} parent=5 // pred_fallthru
        _
    $region6: #{attention_forward.1} parent=1 // loop_footer
      %s26 = sadd.s32 1, %s22
    $region7: #{attention_forward.1} parent=1 // loop_footer_branch
      %21 = sbr.rel target = $region3
    $region8: #{attention_forward.1} parent=1 // loop_exit
      _
    %849 = vsyncpa [#allocation4], 1
    %s850 = scalar_lea.sflag [#allocation4], 1
    %851 = vsyncpa %s850, 1
    %852 = vsyncpa [#allocation7], 1
    %853 = vsyncpa [#allocation5], 1
    %s854 = scalar_lea.sflag [#allocation5], 1
    %855 = vsyncpa %s854, 1
    %856 = vsyncpa [#allocation11], 1
    %s857 = scalar_lea.sflag [#allocation11], 1
    %858 = vsyncpa %s857, 1

</llo_original>
